<compile_context>
chip_gen: v5e
topology: v5e:2x2
jax: 0.10.0
libtpu: 0.0.40
codegen_flags: <defaults>
</compile_context>

<pallas_src>
import functools

import jax
import jax.numpy as jnp
from jax.experimental import pallas as pl
from jax.experimental.pallas import tpu as pltpu

# ~2 MiB f32 tiles: input + output, double-buffered = 8 MiB of scoped VMEM.
# Fits v5e's 16 MiB default, v7x's 32 MiB default, and leaves v6e plenty of
# headroom, while amortizing the per-grid-step pipeline overhead.
_TARGET_LANES = 1024
_TARGET_BLOCK_ROWS = 512
_TARGET_TILE_ELEMS = _TARGET_BLOCK_ROWS * _TARGET_LANES  # 524288 elems

# Activations that stay on the VPU -> no f32 upcast needed (free cast skip).
_VPU_NATIVE = ("relu", "leaky_relu", "identity")


def _apply_activation(x, activation, beta):
    """Elementwise math shared by the kernel body and the host reference."""
    if activation == "swish":
        return x * jax.nn.sigmoid(beta * x)
    if activation == "gelu":
        # Matches the PyTorch module's sigmoid approximation of GELU
        # (NOT exact-erf / tanh GELU).
        return x * jax.nn.sigmoid(1.702 * x)
    if activation == "mish":
        return x * jnp.tanh(jax.nn.softplus(x))
    if activation == "sigmoid":
        return jax.nn.sigmoid(x)
    if activation == "tanh":
        return jnp.tanh(x)
    if activation == "identity":
        return x
    if activation == "relu":
        return jnp.maximum(x, jnp.zeros((), x.dtype))
    if activation == "silu":
        return x * jax.nn.sigmoid(x)
    if activation == "softplus":
        return jax.nn.softplus(x)
    if activation == "elu":
        return jnp.where(x > 0, x, jnp.expm1(x))
    if activation == "leaky_relu":
        return jnp.where(x > 0, x, jnp.asarray(0.01, x.dtype) * x)
    # TODO(synk): other torch.nn.functional activations (e.g. hardswish).
    raise NotImplementedError(f"activation '{activation}' not supported")


def _make_kernel(activation: str):
    """Builds the Pallas kernel body; beta operand only exists for 'swish'."""
    upcast = activation not in _VPU_NATIVE

    if activation == "swish":

        def kernel(beta_ref, x_ref, o_ref):
            x = x_ref[...]
            if upcast:
                x = x.astype(jnp.float32)
            y = _apply_activation(x, activation, beta_ref[0])
            o_ref[...] = y.astype(o_ref.dtype)

        return kernel

    def kernel(x_ref, o_ref):
        x = x_ref[...]
        if upcast:
            x = x.astype(jnp.float32)
        y = _apply_activation(x, activation, None)
        o_ref[...] = y.astype(o_ref.dtype)

    return kernel


def _choose_lanes(n: int):
    """Pick the widest lane count that divides n exactly (no padding)."""
    for w in (4096, 2048, 1024, 512, 256, 128):
        if n % w == 0:
            return w, False
    return _TARGET_LANES, True  # rare fallback: pad to a full lane row


@functools.partial(jax.jit, static_argnames=("activation",))
def activation_pallas(x, beta, activation: str):
    """Applies the Activation module's forward pass via a Pallas TPU kernel.

    Args:
      x: input array of any shape (e.g. NCHW).
      beta: shape-(1,) f32 parameter (only used for 'swish'; init to ones(1)).
      activation: lower-cased activation name.
    Returns:
      Array with the same shape and dtype as `x`.
    """
    orig_shape = x.shape
    orig_dtype = x.dtype
    n = x.size  # static under jit

    lanes, needs_pad = _choose_lanes(n)
    flat = x.reshape(-1)
    if needs_pad:
        n_pad = -(-n // lanes) * lanes
        flat = jnp.pad(flat, (0, n_pad - n))
    rows = flat.shape[0] // lanes
    x2d = flat.reshape(rows, lanes)

    # ~2 MiB (f32) tiles; block_rows is a multiple of 8 or spans all rows.
    max_rows_per_block = max(8, (_TARGET_TILE_ELEMS // lanes) // 8 * 8)
    block_rows = rows if rows <= max_rows_per_block else max_rows_per_block
    grid = (pl.cdiv(rows, block_rows),)

    tile_spec = pl.BlockSpec((block_rows, lanes), lambda i: (i, 0))

    kernel = _make_kernel(activation)
    if activation == "swish":
        in_specs = [pl.BlockSpec(memory_space=pltpu.MemorySpace.SMEM), tile_spec]
        args = (beta.astype(jnp.float32), x2d)
    else:
        in_specs = [tile_spec]
        args = (x2d,)

    out2d = pl.pallas_call(
        kernel,
        out_shape=jax.ShapeDtypeStruct((rows, lanes), orig_dtype),
        grid_spec=pltpu.PrefetchScalarGridSpec(
            num_scalar_prefetch=0,
            grid=grid,
            in_specs=in_specs,
            out_specs=tile_spec,
        ),
        compiler_params=pltpu.CompilerParams(
            dimension_semantics=("parallel",),  # megacore-shardable on v7x
        ),
    )(*args)

    out_flat = out2d.reshape(-1)
    if needs_pad:
        out_flat = out_flat[:n]
    return out_flat.reshape(orig_shape)


def _reference(x, beta, activation):
    xf = x.astype(jnp.float32)
    b = beta[0] if activation == "swish" else None
    return _apply_activation(xf, activation, b)


if __name__ == "__main__":
    key = jax.random.PRNGKey(0)
    # Small NCHW-shaped input consistent with a conv-stack usage.
    x = jax.random.normal(key, (2, 4, 16, 16), dtype=jnp.float32)
    # Odd-sized input to exercise the padded fallback path.
    x_odd = jax.random.normal(jax.random.PRNGKey(1), (3, 5, 7), dtype=jnp.float32)

    # Deterministic parameter init: nn.Parameter(torch.ones(1)) for swish.
    beta = jnp.ones((1,), dtype=jnp.float32)

    ok = True
    acts = ["swish", "gelu", "mish", "sigmoid", "tanh", "relu", "identity",
            "silu", "softplus", "elu", "leaky_relu"]
    for act in acts:
        for inp in (x, x_odd):
            y = activation_pallas(inp, beta, act)
            jax.block_until_ready(y)
            y_ref = _reference(inp, beta, act)
            if y.shape != inp.shape or y.dtype != inp.dtype:
                ok = False
                print(f"shape/dtype mismatch for {act} {inp.shape}")
            if not jnp.allclose(y, y_ref, atol=1e-5, rtol=1e-5):
                ok = False
                print(f"numerics mismatch for {act} {inp.shape}")

    if ok:
        print("KERNEL_OK")
</pallas_src>

<mosaic_0001>
module attributes {stable_mosaic.version = 11 : i64} {
  func.func @kernel(%arg0: i32, %arg1: memref<1xf32, #tpu.memory_space<smem>>, %arg2: memref<1x2048xf32, #tpu.memory_space<vmem>>, %arg3: memref<1x2048xf32, #tpu.memory_space<vmem>>) attributes {dimension_semantics = [#tpu.dimension_semantics<parallel>], iteration_bounds = array<i64: 1>, scalar_prefetch = 0 : i64, scratch_operands = 0 : i64, tpu.core_type = #tpu.core_type<tc>, window_params = [{transform_indices = @transform_0, window_bounds = array<i64: 1>}, {transform_indices = @transform_1, window_bounds = array<i64: 1, 2048>}, {transform_indices = @transform_2, window_bounds = array<i64: 1, 2048>}]} {
    %c0 = arith.constant 0 : index
    %c0_0 = arith.constant 0 : index
    %0 = vector.load %arg2[%c0, %c0_0] : memref<1x2048xf32, #tpu.memory_space<vmem>>, vector<1x2048xf32>
    %c0_1 = arith.constant 0 : index
    %1 = memref.load %arg1[%c0_1] : memref<1xf32, #tpu.memory_space<smem>>
    %2 = vector.broadcast %1 : f32 to vector<1x2048xf32>
    %3 = arith.mulf %2, %0 : vector<1x2048xf32>
    %4 = arith.negf %3 : vector<1x2048xf32>
    %5 = math.exp %4 : vector<1x2048xf32>
    %cst = arith.constant 1.000000e+00 : f32
    %6 = vector.broadcast %cst : f32 to vector<1x2048xf32>
    %7 = arith.addf %6, %5 : vector<1x2048xf32>
    %8 = arith.divf %6, %7 : vector<1x2048xf32>
    %9 = arith.mulf %0, %8 : vector<1x2048xf32>
    %c0_2 = arith.constant 0 : index
    %c0_3 = arith.constant 0 : index
    %10 = vector.load %arg3[%c0_2, %c0_3] : memref<1x2048xf32, #tpu.memory_space<vmem>>, vector<1x2048xf32>
    tpu.vector_store %arg3[%c0_2, %c0_3], %9 {strides = array<i32>} : memref<1x2048xf32, #tpu.memory_space<vmem>>, vector<1x2048xf32>,
    return
  }
  func.func @transform_0(%arg0: i32) -> i32 {
    %c0_i32 = arith.constant 0 : i32
    %c0_i32_0 = arith.constant 0 : i32
    return %c0_i32 : i32
  }
  func.func @transform_1(%arg0: i32) -> (i32, i32) {
    %c0_i32 = arith.constant 0 : i32
    %c0_i32_0 = arith.constant 0 : i32
    return %arg0, %c0_i32 : i32, i32
  }
  func.func @transform_2(%arg0: i32) -> (i32, i32) {
    %c0_i32 = arith.constant 0 : i32
    %c0_i32_0 = arith.constant 0 : i32
    return %arg0, %c0_i32 : i32, i32
  }
}

</mosaic_0001>

<llo_original>
// kernel: activation_pallas.1
$region0: #{activation_pallas.1}
  #allocation0 [shape = 'u32[]', space=smem, size = 0x4, offset = 0x4, fixed_abs, tag = 'smem constant byte address 0x4 - core index']
  #allocation1 [shape = 'u32[72,128]{1,0:T(1,128)}', space=vmem, size = 0x9000, scoped, tag = 'internal scratch']
  #allocation2 [shape = 'f32[1]{0:T(128)S(6)}', space=smem, size = 0x200, scoped, tag = 'scoped memory for activation_pallas.1']
  %s0 = inlined_call_operand.<no memory space> [shape: f32[1], index: 0, kind: input, shape index: {}]
  %s1 = inlined_call_operand.vmem [shape: f32[1,2048], index: 1, kind: input, shape index: {}]
  %s2 = inlined_call_operand.vmem [shape: f32[1,2048], index: 2, kind: output, shape index: {}]
  %s3 = sld [smem:[#allocation0]]
  $region18: #{activation_pallas.1} parent=0
    _
  %s5 = ssub.s32 1, %s3
  %s6 = scalar_select 0, %s5, %s3
  %7 = sst [smem:[#allocation2]] %s0
  // Predicated region
  $region2: #{activation_pallas.1} parent=0 // pred_check
    _
  $region3: #{activation_pallas.1} parent=0 // pred_check_branch
    %9 = sbr.rel (0) target = $region5
  $region4: #{activation_pallas.1} parent=0 // pred_region
    _
  $region5: #{activation_pallas.1} parent=0 // pred_fallthru
    _
  // Predicated region
  $region6: #{activation_pallas.1} parent=0 // pred_check
    _
  $region7: #{activation_pallas.1} parent=0 // pred_check_branch
    %11 = sbr.rel (0) target = $region9
  $region8: #{activation_pallas.1} parent=0 // pred_region
    _
  $region9: #{activation_pallas.1} parent=0 // pred_fallthru
    _
  %v12 = vld [vmem:[%s1] sm:$0xff]
  %v13 = vld [vmem:[%s1 + $0x8] sm:$0xff]
  %s14 = sld [smem:[#allocation2]]
  %v15 = vstv %s14
  %v16 = vmul.f32 %v15, %v12
  %v17 = vmul.f32 %v15, %v13
  %v18 = vxor.u32 %v16, 2147483648
  %v19 = vxor.u32 %v17, 2147483648
  %v20 = vmul.f32 %v18, 1.442695
  %v21 = vpow.pop %v20
  %v22 = vmul.f32 %v19, 1.442695
  %v23 = vpow.pop %v22
  %v24 = vadd.f32 %v21, 1.0
  %v25 = vadd.f32 %v23, 1.0
  %v26 = vrcp.pop %v24
  %v27 = vmul.f32 %v24, %v26
  %v28 = vsub.f32 1.0, %v27
  %v29 = vmul.f32 %v26, %v28
  %v30 = vadd.f32 %v26, %v29
  %vm31 = vweird.f32 %v24
  %vm32 = vweird.f32 %v26
  %vm33 = vmor %vm31, %vm32
  %v34 = vsel %vm33, %v26, %v30
  %v35 = vand.u32 2147483647, %v24
  %vm36 = vcmp.eq.f32.partialorder %v35, 8.507059e+37
  %v37 = vand.u32 %v24, 2147483648
  %v38 = vor.u32 1.1754944e-38, %v37
  %v39 = vsel %vm36, %v38, %v34
  %v40 = vmul.f32 1.0, %v39
  %v41 = vrcp.pop %v25
  %v42 = vmul.f32 %v25, %v41
  %v43 = vsub.f32 1.0, %v42
  %v44 = vmul.f32 %v41, %v43
  %v45 = vadd.f32 %v41, %v44
  %vm46 = vweird.f32 %v25
  %vm47 = vweird.f32 %v41
  %vm48 = vmor %vm46, %vm47
  %v49 = vsel %vm48, %v41, %v45
  %v50 = vand.u32 2147483647, %v25
  %vm51 = vcmp.eq.f32.partialorder %v50, 8.507059e+37
  %v52 = vand.u32 %v25, 2147483648
  %v53 = vor.u32 1.1754944e-38, %v52
  %v54 = vsel %vm51, %v53, %v49
  %v55 = vmul.f32 1.0, %v54
  %v56 = vmul.f32 %v12, %v40
  %v57 = vmul.f32 %v13, %v55
  %58 = vst [vmem:[%s2] sm:$0xff] %v56
  %59 = vst [vmem:[%s2 + $0x8] sm:$0xff] %v57
  // Predicated region
  $region10: #{activation_pallas.1} parent=0 // pred_check
    _
  $region11: #{activation_pallas.1} parent=0 // pred_check_branch
    %61 = sbr.rel (0) target = $region13
  $region12: #{activation_pallas.1} parent=0 // pred_region
    _
  $region13: #{activation_pallas.1} parent=0 // pred_fallthru
    _
  // Predicated region
  $region14: #{activation_pallas.1} parent=0 // pred_check
    _
  $region15: #{activation_pallas.1} parent=0 // pred_check_branch
    %63 = sbr.rel (0) target = $region17
  $region16: #{activation_pallas.1} parent=0 // pred_region
    _
  $region17: #{activation_pallas.1} parent=0 // pred_fallthru
    _

</llo_original>
